<compile_context>
chip_gen: v7x
topology: tpu7x:2x2x1
jax: 0.10.0
libtpu: 0.0.40
codegen_flags: <defaults>
</compile_context>

<pallas_src>
import functools

import jax
import jax.numpy as jnp
from jax.experimental import pallas as pl
from jax.experimental.pallas import tpu as pltpu

P_DROP = 0.3
BN_EPS = 1e-5
_DROP_THRESHOLD = int(P_DROP * (1 << 32))      # keep iff bits >= threshold  -> P(keep)=0.7
_KEEP_SCALE = 1.0 / (1.0 - P_DROP)


def _round_up(a, m):
    return (a + m - 1) // m * m


def _row_mask(tile, n_valid):
    """(1, tile) f32 mask of rows belonging to the real (unpadded) batch."""
    rows = pl.program_id(0) * tile + jax.lax.broadcasted_iota(jnp.int32, (1, tile), 1)
    return (rows < n_valid).astype(jnp.float32)


# --------------------------------------------------------------------------
# Kernels
# --------------------------------------------------------------------------
def _stage1_kernel(x_ref, w1_ref, b1_ref, h1_ref, stats_ref, *, tile, n_valid):
    # Linear(F,128) + ReLU
    h1 = jnp.dot(x_ref[...], w1_ref[...], preferred_element_type=jnp.float32)
    h1 = jnp.maximum(h1 + b1_ref[...], 0.0)
    h1_ref[...] = h1
    # Partial BN1 statistics via MXU (mask also zeroes batch-padding rows).
    m = _row_mask(tile, n_valid)
    s = jnp.dot(m, h1, preferred_element_type=jnp.float32)          # (1, 128)
    sq = jnp.dot(m, h1 * h1, preferred_element_type=jnp.float32)    # (1, 128)
    stats_ref[...] = jnp.concatenate([s, sq], axis=0)[None]         # (1, 2, 128)


def _stage2_kernel(h1_ref, sc1_ref, sh1_ref, w2_ref, b2_ref, h2_ref, stats_ref,
                   *, tile, n_valid):
    # Fused BN1 (single scale/shift) + Linear(128,64) + ReLU
    h1n = h1_ref[...] * sc1_ref[...] + sh1_ref[...]
    h2 = jnp.dot(h1n, w2_ref[...], preferred_element_type=jnp.float32)
    h2 = jnp.maximum(h2 + b2_ref[...], 0.0)
    h2_ref[...] = h2
    # Partial BN2 statistics via MXU.
    m = _row_mask(tile, n_valid)
    s = jnp.dot(m, h2, preferred_element_type=jnp.float32)          # (1, 64)
    sq = jnp.dot(m, h2 * h2, preferred_element_type=jnp.float32)    # (1, 64)
    stats_ref[...] = jnp.concatenate([s, sq], axis=0)[None]         # (1, 2, 64)


def _stage3_kernel(h2_ref, sc2_ref, sh2_ref, bits_ref, w3t_ref, b3_ref, o_ref):
    # Fused BN2 + inverted dropout (integer threshold) + layer_out.
    h2n = h2_ref[...] * sc2_ref[...] + sh2_ref[...]
    keep = bits_ref[...] >= jnp.uint32(_DROP_THRESHOLD)
    hd = jnp.where(keep, h2n * _KEEP_SCALE, 0.0)
    # layer_out as VPU multiply + lane reduction -> lane-dense (1, tile) store.
    out = jnp.sum(hd * w3t_ref[...], axis=1)                        # (tile,)
    o_ref[...] = out[None, :] + b3_ref[...]                         # (1, tile)


# --------------------------------------------------------------------------
# Wrapper
# --------------------------------------------------------------------------
def _bn_scale_shift(stats, gamma, beta, n):
    """Combine per-tile [sum, sumsq] stats into a fused BN scale/shift."""
    s = jnp.sum(stats[:, 0, :], axis=0)
    sq = jnp.sum(stats[:, 1, :], axis=0)
    mean = s / n
    var = jnp.maximum(sq / n - mean * mean, 0.0)          # biased var (torch training BN)
    scale = gamma.reshape(-1) * jax.lax.rsqrt(var + BN_EPS)
    shift = beta.reshape(-1) - mean * scale
    return scale.reshape(1, -1), shift.reshape(1, -1)


def net_forward(x, params, key):
    (w1, b1, g1, be1, w2, b2, g2, be2, w3, b3) = params
    B, F = x.shape
    H1, H2 = w1.shape[1], w2.shape[1]                     # 128, 64

    # Batch tile: multiple of 256 (v6e/v7x MXU) at production sizes, rounded to
    # 8 sublanes for small batches; padded batch is an exact multiple of tile.
    tile = 1024 if B >= 1024 else _round_up(B, 8)
    pb = _round_up(B, tile)
    n_tiles = pb // tile

    if pb != B:
        x = jnp.pad(x, ((0, pb - B), (0, 0)))

    # Dropout bits: one uint32 per (row, hidden) element; each grid tile reads
    # its own slice, so every block gets an independent mask.
    bits = jax.random.bits(key, (pb, H2), dtype=jnp.uint32)

    cparams = pltpu.CompilerParams(
        dimension_semantics=("parallel",),
        vmem_limit_bytes=48 * 1024 * 1024,                # safe on v7x's 64 MiB VMEM
    )
    full = lambda i: (0, 0)      # un-tiled operands (weights / per-channel rows)
    row = lambda i: (i, 0)       # batch-tiled operands
    stat = lambda i: (i, 0, 0)   # per-tile BN statistics

    # ---- stage 1: Linear(F,128) + ReLU + BN1 partial stats -----------------
    h1, stats1 = pl.pallas_call(
        functools.partial(_stage1_kernel, tile=tile, n_valid=B),
        grid=(n_tiles,),
        in_specs=[
            pl.BlockSpec((tile, F), row),
            pl.BlockSpec((F, H1), full),
            pl.BlockSpec((1, H1), full),
        ],
        out_specs=[
            pl.BlockSpec((tile, H1), row),
            pl.BlockSpec((1, 2, H1), stat),
        ],
        out_shape=[
            jax.ShapeDtypeStruct((pb, H1), jnp.float32),
            jax.ShapeDtypeStruct((n_tiles, 2, H1), jnp.float32),
        ],
        compiler_params=cparams,
    )(x, w1, b1)

    scale1, shift1 = _bn_scale_shift(stats1, g1, be1, B)

    # ---- stage 2: BN1 + Linear(128,64) + ReLU + BN2 partial stats ----------
    h2, stats2 = pl.pallas_call(
        functools.partial(_stage2_kernel, tile=tile, n_valid=B),
        grid=(n_tiles,),
        in_specs=[
            pl.BlockSpec((tile, H1), row),
            pl.BlockSpec((1, H1), full),
            pl.BlockSpec((1, H1), full),
            pl.BlockSpec((H1, H2), full),
            pl.BlockSpec((1, H2), full),
        ],
        out_specs=[
            pl.BlockSpec((tile, H2), row),
            pl.BlockSpec((1, 2, H2), stat),
        ],
        out_shape=[
            jax.ShapeDtypeStruct((pb, H2), jnp.float32),
            jax.ShapeDtypeStruct((n_tiles, 2, H2), jnp.float32),
        ],
        compiler_params=cparams,
    )(h1, scale1, shift1, w2, b2)

    scale2, shift2 = _bn_scale_shift(stats2, g2, be2, B)

    # ---- stage 3: BN2 + dropout + Linear(64,1), lane-dense (1, pb) output --
    out_lanes = pl.pallas_call(
        _stage3_kernel,
        grid=(n_tiles,),
        in_specs=[
            pl.BlockSpec((tile, H2), row),
            pl.BlockSpec((1, H2), full),
            pl.BlockSpec((1, H2), full),
            pl.BlockSpec((tile, H2), row),
            pl.BlockSpec((1, H2), full),
            pl.BlockSpec((1, 1), full),
        ],
        out_specs=pl.BlockSpec((1, tile), lambda i: (0, i)),
        out_shape=jax.ShapeDtypeStruct((1, pb), jnp.float32),
        compiler_params=cparams,
    )(h2, scale2, shift2, bits, w3.reshape(1, H2), b3.reshape(1, 1))

    return out_lanes[0, :B].reshape(B, 1)


def init_params(key, input_shape):
    """Deterministic init mimicking PyTorch Linear defaults (U(-1/sqrt(fan_in), +))."""
    ks = jax.random.split(key, 6)

    def linear(kw, kb, fan_in, fan_out):
        bound = 1.0 / jnp.sqrt(float(fan_in))
        w = jax.random.uniform(kw, (fan_in, fan_out), jnp.float32, -bound, bound)
        b = jax.random.uniform(kb, (1, fan_out), jnp.float32, -bound, bound)
        return w, b

    w1, b1 = linear(ks[0], ks[1], input_shape, 128)
    w2, b2 = linear(ks[2], ks[3], 128, 64)
    w3, b3 = linear(ks[4], ks[5], 64, 1)
    # BatchNorm affine params: gamma = 1, beta = 0 (PyTorch default).
    g1 = jnp.ones((1, 128), jnp.float32)
    be1 = jnp.zeros((1, 128), jnp.float32)
    g2 = jnp.ones((1, 64), jnp.float32)
    be2 = jnp.zeros((1, 64), jnp.float32)
    return (w1, b1, g1, be1, w2, b2, g2, be2, w3, b3)


if __name__ == "__main__":
    key = jax.random.PRNGKey(0)
    k_x, k_p, k_d = jax.random.split(key, 3)

    B, F = 8, 32                      # small batch, input_shape = 32
    x = jax.random.normal(k_x, (B, F), jnp.float32)
    params = init_params(k_p, F)

    out = jax.jit(net_forward)(x, params, k_d)
    out = jax.block_until_ready(out)

    assert out.shape == (B, 1), out.shape
    assert bool(jnp.all(jnp.isfinite(out)))
    print("KERNEL_OK")
</pallas_src>

<mosaic_0001>
module attributes {stable_mosaic.version = 11 : i64} {
  func.func @_stage2_kernel(%arg0: i32, %arg1: memref<8x128xf32, #tpu.memory_space<vmem>>, %arg2: memref<1x128xf32, #tpu.memory_space<vmem>>, %arg3: memref<1x128xf32, #tpu.memory_space<vmem>>, %arg4: memref<128x64xf32, #tpu.memory_space<vmem>>, %arg5: memref<1x64xf32, #tpu.memory_space<vmem>>, %arg6: memref<8x64xf32, #tpu.memory_space<vmem>>, %arg7: memref<1x2x64xf32, #tpu.memory_space<vmem>>) attributes {dimension_semantics = [#tpu.dimension_semantics<parallel>], iteration_bounds = array<i64: 1>, scalar_prefetch = 0 : i64, scratch_operands = 0 : i64, tpu.core_type = #tpu.core_type<tc>, window_params = [{transform_indices = @transform_0, window_bounds = array<i64: 8, 128>}, {pipeline_mode = #tpu.pipeline_mode<synchronous>, transform_indices = @transform_1, window_bounds = array<i64: 1, 128>}, {pipeline_mode = #tpu.pipeline_mode<synchronous>, transform_indices = @transform_2, window_bounds = array<i64: 1, 128>}, {pipeline_mode = #tpu.pipeline_mode<synchronous>, transform_indices = @transform_3, window_bounds = array<i64: 128, 64>}, {pipeline_mode = #tpu.pipeline_mode<synchronous>, transform_indices = @transform_4, window_bounds = array<i64: 1, 64>}, {transform_indices = @transform_5, window_bounds = array<i64: 8, 64>}, {transform_indices = @transform_6, window_bounds = array<i64: 1, 2, 64>}]} {
    %c0 = arith.constant 0 : index
    %c0_0 = arith.constant 0 : index
    %0 = vector.load %arg1[%c0, %c0_0] : memref<8x128xf32, #tpu.memory_space<vmem>>, vector<8x128xf32>
    %c0_1 = arith.constant 0 : index
    %c0_2 = arith.constant 0 : index
    %1 = vector.load %arg2[%c0_1, %c0_2] : memref<1x128xf32, #tpu.memory_space<vmem>>, vector<1x128xf32>
    %2 = vector.broadcast %1 : vector<1x128xf32> to vector<8x128xf32>
    %3 = arith.mulf %0, %2 : vector<8x128xf32>
    %c0_3 = arith.constant 0 : index
    %c0_4 = arith.constant 0 : index
    %4 = vector.load %arg3[%c0_3, %c0_4] : memref<1x128xf32, #tpu.memory_space<vmem>>, vector<1x128xf32>
    %5 = vector.broadcast %4 : vector<1x128xf32> to vector<8x128xf32>
    %6 = arith.addf %3, %5 : vector<8x128xf32>
    %c0_5 = arith.constant 0 : index
    %c0_6 = arith.constant 0 : index
    %7 = vector.load %arg4[%c0_5, %c0_6] : memref<128x64xf32, #tpu.memory_space<vmem>>, vector<128x64xf32>
    %cst = arith.constant dense<0.000000e+00> : vector<8x64xf32>
    %8 = tpu.matmul %6, %7, %cst {dimension_numbers = #tpu.dot_dimension_numbers<[1], [0], [0], [1], [0, 0, 1, 1], [], []>} : vector<8x128xf32>, vector<128x64xf32>, vector<8x64xf32> -> vector<8x64xf32>
    %c0_7 = arith.constant 0 : index
    %c0_8 = arith.constant 0 : index
    %9 = vector.load %arg5[%c0_7, %c0_8] : memref<1x64xf32, #tpu.memory_space<vmem>>, vector<1x64xf32>
    %10 = vector.broadcast %9 : vector<1x64xf32> to vector<8x64xf32>
    %11 = arith.addf %8, %10 : vector<8x64xf32>
    %cst_9 = arith.constant 0.000000e+00 : f32
    %12 = vector.broadcast %cst_9 : f32 to vector<8x64xf32>
    %13 = arith.maximumf %11, %12 : vector<8x64xf32>
    %c0_10 = arith.constant 0 : index
    %c0_11 = arith.constant 0 : index
    %14 = vector.load %arg6[%c0_10, %c0_11] : memref<8x64xf32, #tpu.memory_space<vmem>>, vector<8x64xf32>
    tpu.vector_store %arg6[%c0_10, %c0_11], %13 {strides = array<i32>} : memref<8x64xf32, #tpu.memory_space<vmem>>, vector<8x64xf32>,
    %c8_i32 = arith.constant 8 : i32
    %15 = arith.muli %arg0, %c8_i32 : i32
    %16 = tpu.iota {dimensions = array<i32: 1>} : vector<1x8xi32>
    %17 = vector.broadcast %15 : i32 to vector<1x8xi32>
    %18 = arith.addi %17, %16 : vector<1x8xi32>
    %c8_i32_12 = arith.constant 8 : i32
    %19 = vector.broadcast %c8_i32_12 : i32 to vector<1x8xi32>
    %20 = arith.cmpi slt, %18, %19 : vector<1x8xi32>
    %21 = arith.extui %20 : vector<1x8xi1> to vector<1x8xi32>
    %22 = arith.sitofp %21 : vector<1x8xi32> to vector<1x8xf32>
    %cst_13 = arith.constant dense<0.000000e+00> : vector<1x64xf32>
    %23 = tpu.matmul %22, %13, %cst_13 {dimension_numbers = #tpu.dot_dimension_numbers<[1], [0], [0], [1], [0, 0, 1, 1], [], []>} : vector<1x8xf32>, vector<8x64xf32>, vector<1x64xf32> -> vector<1x64xf32>
    %24 = arith.mulf %13, %13 : vector<8x64xf32>
    %cst_14 = arith.constant dense<0.000000e+00> : vector<1x64xf32>
    %25 = tpu.matmul %22, %24, %cst_14 {dimension_numbers = #tpu.dot_dimension_numbers<[1], [0], [0], [1], [0, 0, 1, 1], [], []>} : vector<1x8xf32>, vector<8x64xf32>, vector<1x64xf32> -> vector<1x64xf32>
    %26 = tpu.concatenate %23, %25 in 0 : vector<1x64xf32>, vector<1x64xf32> -> vector<2x64xf32>
    %27 = vector.shape_cast %26 : vector<2x64xf32> to vector<1x2x64xf32>
    %c0_15 = arith.constant 0 : index
    %c0_16 = arith.constant 0 : index
    %c0_17 = arith.constant 0 : index
    %28 = vector.load %arg7[%c0_15, %c0_16, %c0_17] : memref<1x2x64xf32, #tpu.memory_space<vmem>>, vector<1x2x64xf32>
    tpu.vector_store %arg7[%c0_15, %c0_16, %c0_17], %27 {strides = array<i32>} : memref<1x2x64xf32, #tpu.memory_space<vmem>>, vector<1x2x64xf32>,
    return
  }
  func.func @transform_0(%arg0: i32) -> (i32, i32) {
    %c0_i32 = arith.constant 0 : i32
    %c0_i32_0 = arith.constant 0 : i32
    return %arg0, %c0_i32 : i32, i32
  }
  func.func @transform_1(%arg0: i32) -> (i32, i32) {
    %c0_i32 = arith.constant 0 : i32
    %c0_i32_0 = arith.constant 0 : i32
    %c0_i32_1 = arith.constant 0 : i32
    return %c0_i32, %c0_i32_0 : i32, i32
  }
  func.func @transform_2(%arg0: i32) -> (i32, i32) {
    %c0_i32 = arith.constant 0 : i32
    %c0_i32_0 = arith.constant 0 : i32
    %c0_i32_1 = arith.constant 0 : i32
    return %c0_i32, %c0_i32_0 : i32, i32
  }
  func.func @transform_3(%arg0: i32) -> (i32, i32) {
    %c0_i32 = arith.constant 0 : i32
    %c0_i32_0 = arith.constant 0 : i32
    %c0_i32_1 = arith.constant 0 : i32
    return %c0_i32, %c0_i32_0 : i32, i32
  }
  func.func @transform_4(%arg0: i32) -> (i32, i32) {
    %c0_i32 = arith.constant 0 : i32
    %c0_i32_0 = arith.constant 0 : i32
    %c0_i32_1 = arith.constant 0 : i32
    return %c0_i32, %c0_i32_0 : i32, i32
  }
  func.func @transform_5(%arg0: i32) -> (i32, i32) {
    %c0_i32 = arith.constant 0 : i32
    %c0_i32_0 = arith.constant 0 : i32
    return %arg0, %c0_i32 : i32, i32
  }
  func.func @transform_6(%arg0: i32) -> (i32, i32, i32) {
    %c0_i32 = arith.constant 0 : i32
    %c0_i32_0 = arith.constant 0 : i32
    %c0_i32_1 = arith.constant 0 : i32
    return %arg0, %c0_i32, %c0_i32_0 : i32, i32, i32
  }
}

module attributes {stable_mosaic.version = 11 : i64} {
  func.func @_stage1_kernel(%arg0: i32, %arg1: memref<8x32xf32, #tpu.memory_space<vmem>>, %arg2: memref<32x128xf32, #tpu.memory_space<vmem>>, %arg3: memref<1x128xf32, #tpu.memory_space<vmem>>, %arg4: memref<8x128xf32, #tpu.memory_space<vmem>>, %arg5: memref<1x2x128xf32, #tpu.memory_space<vmem>>) attributes {dimension_semantics = [#tpu.dimension_semantics<parallel>], iteration_bounds = array<i64: 1>, scalar_prefetch = 0 : i64, scratch_operands = 0 : i64, tpu.core_type = #tpu.core_type<tc>, window_params = [{transform_indices = @transform_0, window_bounds = array<i64: 8, 32>}, {pipeline_mode = #tpu.pipeline_mode<synchronous>, transform_indices = @transform_1, window_bounds = array<i64: 32, 128>}, {pipeline_mode = #tpu.pipeline_mode<synchronous>, transform_indices = @transform_2, window_bounds = array<i64: 1, 128>}, {transform_indices = @transform_3, window_bounds = array<i64: 8, 128>}, {transform_indices = @transform_4, window_bounds = array<i64: 1, 2, 128>}]} {
    %c0 = arith.constant 0 : index
    %c0_0 = arith.constant 0 : index
    %0 = vector.load %arg1[%c0, %c0_0] : memref<8x32xf32, #tpu.memory_space<vmem>>, vector<8x32xf32>
    %c0_1 = arith.constant 0 : index
    %c0_2 = arith.constant 0 : index
    %1 = vector.load %arg2[%c0_1, %c0_2] : memref<32x128xf32, #tpu.memory_space<vmem>>, vector<32x128xf32>
    %cst = arith.constant dense<0.000000e+00> : vector<8x128xf32>
    %2 = tpu.matmul %0, %1, %cst {dimension_numbers = #tpu.dot_dimension_numbers<[1], [0], [0], [1], [0, 0, 1, 1], [], []>} : vector<8x32xf32>, vector<32x128xf32>, vector<8x128xf32> -> vector<8x128xf32>
    %c0_3 = arith.constant 0 : index
    %c0_4 = arith.constant 0 : index
    %3 = vector.load %arg3[%c0_3, %c0_4] : memref<1x128xf32, #tpu.memory_space<vmem>>, vector<1x128xf32>
    %4 = vector.broadcast %3 : vector<1x128xf32> to vector<8x128xf32>
    %5 = arith.addf %2, %4 : vector<8x128xf32>
    %cst_5 = arith.constant 0.000000e+00 : f32
    %6 = vector.broadcast %cst_5 : f32 to vector<8x128xf32>
    %7 = arith.maximumf %5, %6 : vector<8x128xf32>
    %c0_6 = arith.constant 0 : index
    %c0_7 = arith.constant 0 : index
    %8 = vector.load %arg4[%c0_6, %c0_7] : memref<8x128xf32, #tpu.memory_space<vmem>>, vector<8x128xf32>
    tpu.vector_store %arg4[%c0_6, %c0_7], %7 {strides = array<i32>} : memref<8x128xf32, #tpu.memory_space<vmem>>, vector<8x128xf32>,
    %c8_i32 = arith.constant 8 : i32
    %9 = arith.muli %arg0, %c8_i32 : i32
    %10 = tpu.iota {dimensions = array<i32: 1>} : vector<1x8xi32>
    %11 = vector.broadcast %9 : i32 to vector<1x8xi32>
    %12 = arith.addi %11, %10 : vector<1x8xi32>
    %c8_i32_8 = arith.constant 8 : i32
    %13 = vector.broadcast %c8_i32_8 : i32 to vector<1x8xi32>
    %14 = arith.cmpi slt, %12, %13 : vector<1x8xi32>
    %15 = arith.extui %14 : vector<1x8xi1> to vector<1x8xi32>
    %16 = arith.sitofp %15 : vector<1x8xi32> to vector<1x8xf32>
    %cst_9 = arith.constant dense<0.000000e+00> : vector<1x128xf32>
    %17 = tpu.matmul %16, %7, %cst_9 {dimension_numbers = #tpu.dot_dimension_numbers<[1], [0], [0], [1], [0, 0, 1, 1], [], []>} : vector<1x8xf32>, vector<8x128xf32>, vector<1x128xf32> -> vector<1x128xf32>
    %18 = arith.mulf %7, %7 : vector<8x128xf32>
    %cst_10 = arith.constant dense<0.000000e+00> : vector<1x128xf32>
    %19 = tpu.matmul %16, %18, %cst_10 {dimension_numbers = #tpu.dot_dimension_numbers<[1], [0], [0], [1], [0, 0, 1, 1], [], []>} : vector<1x8xf32>, vector<8x128xf32>, vector<1x128xf32> -> vector<1x128xf32>
    %20 = tpu.concatenate %17, %19 in 0 : vector<1x128xf32>, vector<1x128xf32> -> vector<2x128xf32>
    %21 = vector.shape_cast %20 : vector<2x128xf32> to vector<1x2x128xf32>
    %c0_11 = arith.constant 0 : index
    %c0_12 = arith.constant 0 : index
    %c0_13 = arith.constant 0 : index
    %22 = vector.load %arg5[%c0_11, %c0_12, %c0_13] : memref<1x2x128xf32, #tpu.memory_space<vmem>>, vector<1x2x128xf32>
    tpu.vector_store %arg5[%c0_11, %c0_12, %c0_13], %21 {strides = array<i32>} : memref<1x2x128xf32, #tpu.memory_space<vmem>>, vector<1x2x128xf32>,
    return
  }
  func.func @transform_0(%arg0: i32) -> (i32, i32) {
    %c0_i32 = arith.constant 0 : i32
    %c0_i32_0 = arith.constant 0 : i32
    return %arg0, %c0_i32 : i32, i32
  }
  func.func @transform_1(%arg0: i32) -> (i32, i32) {
    %c0_i32 = arith.constant 0 : i32
    %c0_i32_0 = arith.constant 0 : i32
    %c0_i32_1 = arith.constant 0 : i32
    return %c0_i32, %c0_i32_0 : i32, i32
  }
  func.func @transform_2(%arg0: i32) -> (i32, i32) {
    %c0_i32 = arith.constant 0 : i32
    %c0_i32_0 = arith.constant 0 : i32
    %c0_i32_1 = arith.constant 0 : i32
    return %c0_i32, %c0_i32_0 : i32, i32
  }
  func.func @transform_3(%arg0: i32) -> (i32, i32) {
    %c0_i32 = arith.constant 0 : i32
    %c0_i32_0 = arith.constant 0 : i32
    return %arg0, %c0_i32 : i32, i32
  }
  func.func @transform_4(%arg0: i32) -> (i32, i32, i32) {
    %c0_i32 = arith.constant 0 : i32
    %c0_i32_0 = arith.constant 0 : i32
    %c0_i32_1 = arith.constant 0 : i32
    return %arg0, %c0_i32, %c0_i32_0 : i32, i32, i32
  }
}

module attributes {stable_mosaic.version = 11 : i64} {
  func.func @_stage3_kernel(%arg0: i32, %arg1: memref<8x64xf32, #tpu.memory_space<vmem>>, %arg2: memref<1x64xf32, #tpu.memory_space<vmem>>, %arg3: memref<1x64xf32, #tpu.memory_space<vmem>>, %arg4: memref<8x64xi32, #tpu.memory_space<vmem>>, %arg5: memref<1x64xf32, #tpu.memory_space<vmem>>, %arg6: memref<1x1xf32, #tpu.memory_space<vmem>>, %arg7: memref<1x8xf32, #tpu.memory_space<vmem>>) attributes {dimension_semantics = [#tpu.dimension_semantics<parallel>], iteration_bounds = array<i64: 1>, scalar_prefetch = 0 : i64, scratch_operands = 0 : i64, tpu.core_type = #tpu.core_type<tc>, window_params = [{transform_indices = @transform_0, window_bounds = array<i64: 8, 64>}, {pipeline_mode = #tpu.pipeline_mode<synchronous>, transform_indices = @transform_1, window_bounds = array<i64: 1, 64>}, {pipeline_mode = #tpu.pipeline_mode<synchronous>, transform_indices = @transform_2, window_bounds = array<i64: 1, 64>}, {transform_indices = @transform_3, window_bounds = array<i64: 8, 64>}, {pipeline_mode = #tpu.pipeline_mode<synchronous>, transform_indices = @transform_4, window_bounds = array<i64: 1, 64>}, {pipeline_mode = #tpu.pipeline_mode<synchronous>, transform_indices = @transform_5, window_bounds = array<i64: 1, 1>}, {transform_indices = @transform_6, window_bounds = array<i64: 1, 8>}]} {
    %c0 = arith.constant 0 : index
    %c0_0 = arith.constant 0 : index
    %0 = vector.load %arg1[%c0, %c0_0] : memref<8x64xf32, #tpu.memory_space<vmem>>, vector<8x64xf32>
    %c0_1 = arith.constant 0 : index
    %c0_2 = arith.constant 0 : index
    %1 = vector.load %arg2[%c0_1, %c0_2] : memref<1x64xf32, #tpu.memory_space<vmem>>, vector<1x64xf32>
    %2 = vector.broadcast %1 : vector<1x64xf32> to vector<8x64xf32>
    %3 = arith.mulf %0, %2 : vector<8x64xf32>
    %c0_3 = arith.constant 0 : index
    %c0_4 = arith.constant 0 : index
    %4 = vector.load %arg3[%c0_3, %c0_4] : memref<1x64xf32, #tpu.memory_space<vmem>>, vector<1x64xf32>
    %5 = vector.broadcast %4 : vector<1x64xf32> to vector<8x64xf32>
    %6 = arith.addf %3, %5 : vector<8x64xf32>
    %c0_5 = arith.constant 0 : index
    %c0_6 = arith.constant 0 : index
    %7 = vector.load %arg4[%c0_5, %c0_6] : memref<8x64xi32, #tpu.memory_space<vmem>>, vector<8x64xi32>
    %c1288490188_i32 = arith.constant 1288490188 : i32
    %8 = vector.broadcast %c1288490188_i32 : i32 to vector<8x64xi32>
    %9 = arith.cmpi uge, %7, %8 : vector<8x64xi32>
    %cst = arith.constant 1.42857146 : f32
    %10 = vector.broadcast %cst : f32 to vector<8x64xf32>
    %11 = arith.mulf %6, %10 : vector<8x64xf32>
    %cst_7 = arith.constant 0.000000e+00 : f32
    %12 = vector.broadcast %cst_7 : f32 to vector<8x64xf32>
    %13 = arith.select %9, %11, %12 : vector<8x64xi1>, vector<8x64xf32>
    %c0_8 = arith.constant 0 : index
    %c0_9 = arith.constant 0 : index
    %14 = vector.load %arg5[%c0_8, %c0_9] : memref<1x64xf32, #tpu.memory_space<vmem>>, vector<1x64xf32>
    %15 = vector.broadcast %14 : vector<1x64xf32> to vector<8x64xf32>
    %16 = arith.mulf %13, %15 : vector<8x64xf32>
    %cst_10 = arith.constant dense<0.000000e+00> : vector<8xf32>
    %17 = vector.multi_reduction <add>, %16, %cst_10 [1] : vector<8x64xf32> to vector<8xf32>
    %18 = vector.shape_cast %17 : vector<8xf32> to vector<1x8xf32>
    %c0_11 = arith.constant 0 : index
    %c0_12 = arith.constant 0 : index
    %19 = vector.load %arg6[%c0_11, %c0_12] : memref<1x1xf32, #tpu.memory_space<vmem>>, vector<1x1xf32>
    %20 = vector.broadcast %19 : vector<1x1xf32> to vector<1x8xf32>
    %21 = arith.addf %18, %20 : vector<1x8xf32>
    %c0_13 = arith.constant 0 : index
    %c0_14 = arith.constant 0 : index
    %22 = vector.load %arg7[%c0_13, %c0_14] : memref<1x8xf32, #tpu.memory_space<vmem>>, vector<1x8xf32>
    tpu.vector_store %arg7[%c0_13, %c0_14], %21 {strides = array<i32>} : memref<1x8xf32, #tpu.memory_space<vmem>>, vector<1x8xf32>,
    return
  }
  func.func @transform_0(%arg0: i32) -> (i32, i32) {
    %c0_i32 = arith.constant 0 : i32
    %c0_i32_0 = arith.constant 0 : i32
    return %arg0, %c0_i32 : i32, i32
  }
  func.func @transform_1(%arg0: i32) -> (i32, i32) {
    %c0_i32 = arith.constant 0 : i32
    %c0_i32_0 = arith.constant 0 : i32
    %c0_i32_1 = arith.constant 0 : i32
    return %c0_i32, %c0_i32_0 : i32, i32
  }
  func.func @transform_2(%arg0: i32) -> (i32, i32) {
    %c0_i32 = arith.constant 0 : i32
    %c0_i32_0 = arith.constant 0 : i32
    %c0_i32_1 = arith.constant 0 : i32
    return %c0_i32, %c0_i32_0 : i32, i32
  }
  func.func @transform_3(%arg0: i32) -> (i32, i32) {
    %c0_i32 = arith.constant 0 : i32
    %c0_i32_0 = arith.constant 0 : i32
    return %arg0, %c0_i32 : i32, i32
  }
  func.func @transform_4(%arg0: i32) -> (i32, i32) {
    %c0_i32 = arith.constant 0 : i32
    %c0_i32_0 = arith.constant 0 : i32
    %c0_i32_1 = arith.constant 0 : i32
    return %c0_i32, %c0_i32_0 : i32, i32
  }
  func.func @transform_5(%arg0: i32) -> (i32, i32) {
    %c0_i32 = arith.constant 0 : i32
    %c0_i32_0 = arith.constant 0 : i32
    %c0_i32_1 = arith.constant 0 : i32
    return %c0_i32, %c0_i32_0 : i32, i32
  }
  func.func @transform_6(%arg0: i32) -> (i32, i32) {
    %c0_i32 = arith.constant 0 : i32
    %c0_i32_0 = arith.constant 0 : i32
    return %c0_i32, %arg0 : i32, i32
  }
}

</mosaic_0001>

<llo_original>
// kernel: net_forward.3
$region0: #{net_forward.3}
  #allocation0 [shape = 'u32[]', space=smem, size = 0x4, offset = 0x4, fixed_abs, tag = 'smem constant byte address 0x4 - core index']
  #allocation1 [shape = 'u32[144,128]{1,0:T(1,128)}', space=vmem, size = 0x12000, scoped, tag = 'internal scratch']
  %s0 = inlined_call_operand.hbm [shape: f32[8,32], index: 0, kind: input, shape index: {}]
  %s1 = inlined_call_operand.vmem [shape: f32[32,128], index: 1, kind: input, shape index: {}]
  %s2 = inlined_call_operand.vmem [shape: f32[1,128], index: 2, kind: input, shape index: {}]
  %s3 = inlined_call_operand.vmem [shape: f32[8,128], index: 3, kind: output, shape index: {0}]
  %s4 = inlined_call_operand.vmem [shape: f32[1,2,128], index: 4, kind: output, shape index: {1}]
  %5 = xla_tuple %s3, %s4
  %s6 = sld [smem:[#allocation0]]
  $region34: #{net_forward.3} parent=0
    _
  %s8 = ssub.s32 1, %s6
  %s9 = scalar_select 0, %s8, %s6
  $region1: #{net_forward.3} parent=0
    #allocation2 [shape = 'u8[4096]{0}', space=vmem, size = 0x1000, scoped, tag = 'input window, operand 0, single buffered']
    #allocation3 [shape = 's32[1]{0}', space=sflag, size = 0x4, scoped, tag = 'scoped memory for net_forward.3']
    %10 = vsyncpa [#allocation3], 0
    // Predicated region
    $region2: #{net_forward.3} parent=1 // pred_check
      _
    $region3: #{net_forward.3} parent=1 // pred_check_branch
      %12 = sbr.rel (0) target = $region5
    $region4: #{net_forward.3} parent=1 // pred_region
      %s14 = ssub.s32 128, 128
      %15 = vsyncadd [#allocation3], %s14
      %s17 = sshll.u32 [#allocation2], 4
      %s18 = int_to_ptr.vmem [resolvable:$true] %s17
      %20 = dma.hbm_to_vmem [thread:$0]  %s0, 128, %s18, [#allocation3]
    $region5: #{net_forward.3} parent=1 // pred_fallthru
      _
    // Predicated region
    $region6: #{net_forward.3} parent=1 // pred_check
      _
    $region7: #{net_forward.3} parent=1 // pred_check_branch
      %22 = sbr.rel (0) target = $region9
    $region8: #{net_forward.3} parent=1 // pred_region
      _
    $region9: #{net_forward.3} parent=1 // pred_fallthru
      _
    // Predicated region
    $region10: #{net_forward.3} parent=1 // pred_check
      _
    $region11: #{net_forward.3} parent=1 // pred_check_branch
      %24 = sbr.rel (0) target = $region13
    $region12: #{net_forward.3} parent=1 // pred_region
      _
    $region13: #{net_forward.3} parent=1 // pred_fallthru
      _
    // Predicated region
    $region14: #{net_forward.3} parent=1 // pred_check
      _
    $region15: #{net_forward.3} parent=1 // pred_check_branch
      %26 = sbr.rel (0) target = $region17
    $region16: #{net_forward.3} parent=1 // pred_region
      %27 = dma.done [#allocation3], 128
    $region17: #{net_forward.3} parent=1 // pred_fallthru
      _
    %v28 = vld [vmem:[#allocation2] sm:$0xff]
    %v29 = vld [vmem:[%s1] sm:$0xff]
    %v30 = vld [vmem:[%s1 + $0x8] sm:$0xff]
    %v31 = vld [vmem:[%s1 + $0x10] sm:$0xff]
    %v32 = vld [vmem:[%s1 + $0x18] sm:$0xff]
    %v33 = vld [vmem:[%s2] sm:$0x1]
    %v35 = vlaneseq
    %v36 = vshrl.u32 %v35, 7
    %v37 = vsub.s32 0, %v36
    %v38 = vrot.slane %v33, %v37
    %vm40 = vcmask 261120
    %v42 = vsel %vm40, %v28, 0
    %44 = vmatprep.subr.mxu0 0.0
    %45 = vmatpush1.msra.mxu0 %v29
    %46 = vmatprep.subr.mxu0 0.0
    %47 = vmatpush1.msra.mxu0 %v30
    %48 = vmatprep.subr.mxu0 0.0
    %49 = vmatpush1.msra.mxu0 %v31
    %50 = vmatprep.subr.mxu0 0.0
    %51 = vmatpush1.msra.mxu0 %v32
    %52 = vmatprep.subr.mxu0 0.0
    %53 = vmatpush1.msra.mxu0 0.0
    %54 = vmatprep.subr.mxu0 0.0
    %55 = vmatpush1.msra.mxu0 0.0
    %56 = vmatprep.subr.mxu0 0.0
    %57 = vmatpush1.msra.mxu0 0.0
    %58 = vmatprep.subr.mxu0 0.0
    %59 = vmatpush1.msra.mxu0 0.0
    %60 = vmatprep.subr.mxu0 0.0
    %61 = vmatpush1.msra.mxu0 0.0
    %62 = vmatprep.subr.mxu0 0.0
    %63 = vmatpush1.msra.mxu0 0.0
    %64 = vmatprep.subr.mxu0 0.0
    %65 = vmatpush1.msra.mxu0 0.0
    %66 = vmatprep.subr.mxu0 0.0
    %67 = vmatpush1.msra.mxu0 0.0
    %68 = vmatprep.subr.mxu0 0.0
    %69 = vmatpush1.msra.mxu0 0.0
    %70 = vmatprep.subr.mxu0 0.0
    %71 = vmatpush1.msra.mxu0 0.0
    %72 = vmatprep.subr.mxu0 0.0
    %73 = vmatpush1.msra.mxu0 0.0
    %74 = vmatprep.subr.mxu0 0.0
    %75 = vmatpush1.msra.mxu0 0.0
    %76 = vmatprep.subr.mxu0 0.0
    %77 = vmatpush1.msra.mxu0 0.0
    %78 = vmatprep.subr.mxu0 0.0
    %79 = vmatpush1.msra.mxu0 0.0
    %80 = vmatprep.subr.mxu0 0.0
    %81 = vmatpush1.msra.mxu0 0.0
    %82 = vmatprep.subr.mxu0 0.0
    %83 = vmatpush1.msra.mxu0 0.0
    %84 = vmatprep.subr.mxu0 0.0
    %85 = vmatpush1.msra.mxu0 0.0
    %86 = vmatprep.subr.mxu0 0.0
    %87 = vmatpush1.msra.mxu0 0.0
    %88 = vmatprep.subr.mxu0 0.0
    %89 = vmatpush1.msra.mxu0 0.0
    %90 = vmatprep.subr.mxu0 0.0
    %91 = vmatpush1.msra.mxu0 0.0
    %92 = vmatprep.subr.mxu0 0.0
    %93 = vmatpush1.msra.mxu0 0.0
    %94 = vmatprep.subr.mxu0 0.0
    %95 = vmatpush1.msra.mxu0 0.0
    %96 = vmatprep.subr.mxu0 0.0
    %97 = vmatpush1.msra.mxu0 0.0
    %98 = vmatprep.subr.mxu0 0.0
    %99 = vmatpush1.msra.mxu0 0.0
    %100 = vmatprep.subr.mxu0 0.0
    %101 = vmatpush1.msra.mxu0 0.0
    %102 = vmatprep.subr.mxu0 0.0
    %103 = vmatpush1.msra.mxu0 0.0
    %104 = vmatprep.subr.mxu0 0.0
    %105 = vmatpush1.msra.mxu0 0.0
    %106 = vmatprep.subr.mxu0 0.0
    %107 = vmatpush1.msra.mxu0 0.0
    %108 = vmatprep.mubr.f32.mxu0 0.0
    %109 = vmatmul.mubr.f32.gmra.mrb[0].mxu0 %v42
    %v110 = vpop.f32.mrb[0].mxu0
    %v111 = vadd.f32 %v38, %v110
    %v112 = vpop.f32.mrb[0].mxu0
    %113 = vdwg.mxu0
    %v114 = vmax.f32 %v111, 0.0
    %115 = vst [vmem:[%s3] sm:$0xff] %v114
    %s116 = smul.u32 0, 8
    %v117 = vlaneseq
    %v118 = vand.u32 %v117, 127
    %v119 = vstv %s116
    %v120 = vadd.s32 %v119, %v118
    %vm121 = vcmp.lt.s32.totalorder %v120, 8
    %v122 = vsel %vm121, 1, 0
    %v123 = vcvt.s32.f32 %v122
    %vm124 = vcmask 64512
    %v126 = vsel %vm124, %v123, 0
    %128 = vmatprep.subr.mxu0 0.0
    %129 = vmatpush1.msra.mxu0 %v114
    %130 = vmatprep.subr.mxu0 0.0
    %131 = vmatpush1.msra.mxu0 0.0
    %132 = vmatprep.subr.mxu0 0.0
    %133 = vmatpush1.msra.mxu0 0.0
    %134 = vmatprep.subr.mxu0 0.0
    %135 = vmatpush1.msra.mxu0 0.0
    %136 = vmatprep.subr.mxu0 0.0
    %137 = vmatpush1.msra.mxu0 0.0
    %138 = vmatprep.subr.mxu0 0.0
    %139 = vmatpush1.msra.mxu0 0.0
    %140 = vmatprep.subr.mxu0 0.0
    %141 = vmatpush1.msra.mxu0 0.0
    %142 = vmatprep.subr.mxu0 0.0
    %143 = vmatpush1.msra.mxu0 0.0
    %144 = vmatprep.subr.mxu0 0.0
    %145 = vmatpush1.msra.mxu0 0.0
    %146 = vmatprep.subr.mxu0 0.0
    %147 = vmatpush1.msra.mxu0 0.0
    %148 = vmatprep.subr.mxu0 0.0
    %149 = vmatpush1.msra.mxu0 0.0
    %150 = vmatprep.subr.mxu0 0.0
    %151 = vmatpush1.msra.mxu0 0.0
    %152 = vmatprep.subr.mxu0 0.0
    %153 = vmatpush1.msra.mxu0 0.0
    %154 = vmatprep.subr.mxu0 0.0
    %155 = vmatpush1.msra.mxu0 0.0
    %156 = vmatprep.subr.mxu0 0.0
    %157 = vmatpush1.msra.mxu0 0.0
    %158 = vmatprep.subr.mxu0 0.0
    %159 = vmatpush1.msra.mxu0 0.0
    %160 = vmatprep.subr.mxu0 0.0
    %161 = vmatpush1.msra.mxu0 0.0
    %162 = vmatprep.subr.mxu0 0.0
    %163 = vmatpush1.msra.mxu0 0.0
    %164 = vmatprep.subr.mxu0 0.0
    %165 = vmatpush1.msra.mxu0 0.0
    %166 = vmatprep.subr.mxu0 0.0
    %167 = vmatpush1.msra.mxu0 0.0
    %168 = vmatprep.subr.mxu0 0.0
    %169 = vmatpush1.msra.mxu0 0.0
    %170 = vmatprep.subr.mxu0 0.0
    %171 = vmatpush1.msra.mxu0 0.0
    %172 = vmatprep.subr.mxu0 0.0
    %173 = vmatpush1.msra.mxu0 0.0
    %174 = vmatprep.subr.mxu0 0.0
    %175 = vmatpush1.msra.mxu0 0.0
    %176 = vmatprep.subr.mxu0 0.0
    %177 = vmatpush1.msra.mxu0 0.0
    %178 = vmatprep.subr.mxu0 0.0
    %179 = vmatpush1.msra.mxu0 0.0
    %180 = vmatprep.subr.mxu0 0.0
    %181 = vmatpush1.msra.mxu0 0.0
    %182 = vmatprep.subr.mxu0 0.0
    %183 = vmatpush1.msra.mxu0 0.0
    %184 = vmatprep.subr.mxu0 0.0
    %185 = vmatpush1.msra.mxu0 0.0
    %186 = vmatprep.subr.mxu0 0.0
    %187 = vmatpush1.msra.mxu0 0.0
    %188 = vmatprep.subr.mxu0 0.0
    %189 = vmatpush1.msra.mxu0 0.0
    %190 = vmatprep.subr.mxu0 0.0
    %191 = vmatpush1.msra.mxu0 0.0
    %192 = vmatprep.mubr.f32.mxu0 0.0
    %193 = vmatmul.mubr.f32.gmra.mrb[0].mxu0 %v126
    %v194 = vpop.f32.mrb[0].mxu0
    %v195 = vadd.f32 0.0, %v194
    %v196 = vpop.f32.mrb[0].mxu0
    %197 = vdwg.mxu0
    %v198 = vmul.f32 %v114, %v114
    %199 = vmatprep.subr.mxu0 0.0
    %200 = vmatpush1.msra.mxu0 %v198
    %201 = vmatprep.subr.mxu0 0.0
    %202 = vmatpush1.msra.mxu0 0.0
    %203 = vmatprep.subr.mxu0 0.0
    %204 = vmatpush1.msra.mxu0 0.0
    %205 = vmatprep.subr.mxu0 0.0
    %206 = vmatpush1.msra.mxu0 0.0
    %207 = vmatprep.subr.mxu0 0.0
    %208 = vmatpush1.msra.mxu0 0.0
    %209 = vmatprep.subr.mxu0 0.0
    %210 = vmatpush1.msra.mxu0 0.0
    %211 = vmatprep.subr.mxu0 0.0
    %212 = vmatpush1.msra.mxu0 0.0
    %213 = vmatprep.subr.mxu0 0.0
    %214 = vmatpush1.msra.mxu0 0.0
    %215 = vmatprep.subr.mxu0 0.0
    %216 = vmatpush1.msra.mxu0 0.0
    %217 = vmatprep.subr.mxu0 0.0
    %218 = vmatpush1.msra.mxu0 0.0
    %219 = vmatprep.subr.mxu0 0.0
    %220 = vmatpush1.msra.mxu0 0.0
    %221 = vmatprep.subr.mxu0 0.0
    %222 = vmatpush1.msra.mxu0 0.0
    %223 = vmatprep.subr.mxu0 0.0
    %224 = vmatpush1.msra.mxu0 0.0
    %225 = vmatprep.subr.mxu0 0.0
    %226 = vmatpush1.msra.mxu0 0.0
    %227 = vmatprep.subr.mxu0 0.0
    %228 = vmatpush1.msra.mxu0 0.0
    %229 = vmatprep.subr.mxu0 0.0
    %230 = vmatpush1.msra.mxu0 0.0
    %231 = vmatprep.subr.mxu0 0.0
    %232 = vmatpush1.msra.mxu0 0.0
    %233 = vmatprep.subr.mxu0 0.0
    %234 = vmatpush1.msra.mxu0 0.0
    %235 = vmatprep.subr.mxu0 0.0
    %236 = vmatpush1.msra.mxu0 0.0
    %237 = vmatprep.subr.mxu0 0.0
    %238 = vmatpush1.msra.mxu0 0.0
    %239 = vmatprep.subr.mxu0 0.0
    %240 = vmatpush1.msra.mxu0 0.0
    %241 = vmatprep.subr.mxu0 0.0
    %242 = vmatpush1.msra.mxu0 0.0
    %243 = vmatprep.subr.mxu0 0.0
    %244 = vmatpush1.msra.mxu0 0.0
    %245 = vmatprep.subr.mxu0 0.0
    %246 = vmatpush1.msra.mxu0 0.0
    %247 = vmatprep.subr.mxu0 0.0
    %248 = vmatpush1.msra.mxu0 0.0
    %249 = vmatprep.subr.mxu0 0.0
    %250 = vmatpush1.msra.mxu0 0.0
    %251 = vmatprep.subr.mxu0 0.0
    %252 = vmatpush1.msra.mxu0 0.0
    %253 = vmatprep.subr.mxu0 0.0
    %254 = vmatpush1.msra.mxu0 0.0
    %255 = vmatprep.subr.mxu0 0.0
    %256 = vmatpush1.msra.mxu0 0.0
    %257 = vmatprep.subr.mxu0 0.0
    %258 = vmatpush1.msra.mxu0 0.0
    %259 = vmatprep.subr.mxu0 0.0
    %260 = vmatpush1.msra.mxu0 0.0
    %261 = vmatprep.subr.mxu0 0.0
    %262 = vmatpush1.msra.mxu0 0.0
    %263 = vmatprep.mubr.f32.mxu0 0.0
    %264 = vmatmul.mubr.f32.gmra.mrb[0].mxu0 %v126
    %v265 = vpop.f32.mrb[0].mxu0
    %v266 = vadd.f32 0.0, %v265
    %v267 = vpop.f32.mrb[0].mxu0
    %268 = vdwg.mxu0
    %v270 = vrot.slane %v266, 7
    %vm272 = vcmask 1040384
    %v273 = vsel %vm272, %v195, %v270
    %274 = vst [vmem:[%s4] sm:$0x3] %v273
    // Predicated region
    $region18: #{net_forward.3} parent=1 // pred_check
      _
    $region19: #{net_forward.3} parent=1 // pred_check_branch
      %276 = sbr.rel (0) target = $region21
    $region20: #{net_forward.3} parent=1 // pred_region
      _
    $region21: #{net_forward.3} parent=1 // pred_fallthru
      _
    // Predicated region
    $region22: #{net_forward.3} parent=1 // pred_check
      _
    $region23: #{net_forward.3} parent=1 // pred_check_branch
      %278 = sbr.rel (0) target = $region25
    $region24: #{net_forward.3} parent=1 // pred_region
      _
    $region25: #{net_forward.3} parent=1 // pred_fallthru
      _
    // Predicated region
    $region26: #{net_forward.3} parent=1 // pred_check
      _
    $region27: #{net_forward.3} parent=1 // pred_check_branch
      %280 = sbr.rel (0) target = $region29
    $region28: #{net_forward.3} parent=1 // pred_region
      _
    $region29: #{net_forward.3} parent=1 // pred_fallthru
      _
    // Predicated region
    $region30: #{net_forward.3} parent=1 // pred_check
      _
    $region31: #{net_forward.3} parent=1 // pred_check_branch
      %282 = sbr.rel (0) target = $region33
    $region32: #{net_forward.3} parent=1 // pred_region
      _
    $region33: #{net_forward.3} parent=1 // pred_fallthru
      _
    %283 = vsyncpa [#allocation3], 1

// kernel: net_forward.4
$region0: #{net_forward.4}
  #allocation0 [shape = 'u32[]', space=smem, size = 0x4, offset = 0x4, fixed_abs, tag = 'smem constant byte address 0x4 - core index']
  #allocation1 [shape = 'u32[144,128]{1,0:T(1,128)}', space=vmem, size = 0x12000, scoped, tag = 'internal scratch']
  %s0 = inlined_call_operand.vmem [shape: f32[8,128], index: 0, kind: input, shape index: {}]
  %s1 = inlined_call_operand.vmem [shape: f32[1,128], index: 1, kind: input, shape index: {}]
  %s2 = inlined_call_operand.vmem [shape: f32[1,128], index: 2, kind: input, shape index: {}]
  %s3 = inlined_call_operand.vmem [shape: f32[128,64], index: 3, kind: input, shape index: {}]
  %s4 = inlined_call_operand.vmem [shape: f32[1,64], index: 4, kind: input, shape index: {}]
  %s5 = inlined_call_operand.vmem [shape: f32[8,64], index: 5, kind: output, shape index: {0}]
  %s6 = inlined_call_operand.vmem [shape: f32[1,2,64], index: 6, kind: output, shape index: {1}]
  %7 = xla_tuple %s5, %s6
  %s8 = sld [smem:[#allocation0]]
  $region38: #{net_forward.4} parent=0
    _
  %s10 = ssub.s32 1, %s8
  %s11 = scalar_select 0, %s10, %s8
  // Predicated region
  $region2: #{net_forward.4} parent=0 // pred_check
    _
  $region3: #{net_forward.4} parent=0 // pred_check_branch
    %13 = sbr.rel (0) target = $region5
  $region4: #{net_forward.4} parent=0 // pred_region
    _
  $region5: #{net_forward.4} parent=0 // pred_fallthru
    _
  // Predicated region
  $region6: #{net_forward.4} parent=0 // pred_check
    _
  $region7: #{net_forward.4} parent=0 // pred_check_branch
    %15 = sbr.rel (0) target = $region9
  $region8: #{net_forward.4} parent=0 // pred_region
    _
  $region9: #{net_forward.4} parent=0 // pred_fallthru
    _
  // Predicated region
  $region10: #{net_forward.4} parent=0 // pred_check
    _
  $region11: #{net_forward.4} parent=0 // pred_check_branch
    %17 = sbr.rel (0) target = $region13
  $region12: #{net_forward.4} parent=0 // pred_region
    _
  $region13: #{net_forward.4} parent=0 // pred_fallthru
    _
  // Predicated region
  $region14: #{net_forward.4} parent=0 // pred_check
    _
  $region15: #{net_forward.4} parent=0 // pred_check_branch
    %19 = sbr.rel (0) target = $region17
  $region16: #{net_forward.4} parent=0 // pred_region
    _
  $region17: #{net_forward.4} parent=0 // pred_fallthru
    _
  // Predicated region
  $region18: #{net_forward.4} parent=0 // pred_check
    _
  $region19: #{net_forward.4} parent=0 // pred_check_branch
    %21 = sbr.rel (0) target = $region21
  $region20: #{net_forward.4} parent=0 // pred_region
    _
  $region21: #{net_forward.4} parent=0 // pred_fallthru
    _
  %v22 = vld [vmem:[%s0] sm:$0xff]
  %v23 = vld [vmem:[%s1] sm:$0x1]
  %v25 = vlaneseq
  %v26 = vshrl.u32 %v25, 7
  %v27 = vsub.s32 0, %v26
  %v28 = vrot.slane %v23, %v27
  %v30 = vmul.f32 %v22, %v28
  %v31 = vld [vmem:[%s2] sm:$0x1]
  %v33 = vlaneseq
  %v34 = vshrl.u32 %v33, 7
  %v35 = vsub.s32 0, %v34
  %v36 = vrot.slane %v31, %v35
  %v38 = vadd.f32 %v30, %v36
  %v39 = vld [vmem:[%s3] sm:$0xff]
  %v40 = vld [vmem:[%s3 + $0x8] sm:$0xff]
  %v41 = vld [vmem:[%s3 + $0x10] sm:$0xff]
  %v42 = vld [vmem:[%s3 + $0x18] sm:$0xff]
  %v43 = vld [vmem:[%s3 + $0x20] sm:$0xff]
  %v44 = vld [vmem:[%s3 + $0x28] sm:$0xff]
  %v45 = vld [vmem:[%s3 + $0x30] sm:$0xff]
  %v46 = vld [vmem:[%s3 + $0x38] sm:$0xff]
  %v47 = vld [vmem:[%s3 + $0x40] sm:$0xff]
  %v48 = vld [vmem:[%s3 + $0x48] sm:$0xff]
  %v49 = vld [vmem:[%s3 + $0x50] sm:$0xff]
  %v50 = vld [vmem:[%s3 + $0x58] sm:$0xff]
  %v51 = vld [vmem:[%s3 + $0x60] sm:$0xff]
  %v52 = vld [vmem:[%s3 + $0x68] sm:$0xff]
  %v53 = vld [vmem:[%s3 + $0x70] sm:$0xff]
  %v54 = vld [vmem:[%s3 + $0x78] sm:$0xff]
  %v55 = vld [vmem:[%s4] sm:$0x1]
  %v57 = vlaneseq
  %v58 = vshrl.u32 %v57, 7
  %v59 = vsub.s32 0, %v58
  %v60 = vrot.slane %v55, %v59
  %62 = vmatprep.subr.mxu0 0.0
  %63 = vmatpush1.msra.mxu0 %v39
  %64 = vmatprep.subr.mxu0 0.0
  %65 = vmatpush1.msra.mxu0 %v40
  %66 = vmatprep.subr.mxu0 0.0
  %67 = vmatpush1.msra.mxu0 %v41
  %68 = vmatprep.subr.mxu0 0.0
  %69 = vmatpush1.msra.mxu0 %v42
  %70 = vmatprep.subr.mxu0 0.0
  %71 = vmatpush1.msra.mxu0 %v43
  %72 = vmatprep.subr.mxu0 0.0
  %73 = vmatpush1.msra.mxu0 %v44
  %74 = vmatprep.subr.mxu0 0.0
  %75 = vmatpush1.msra.mxu0 %v45
  %76 = vmatprep.subr.mxu0 0.0
  %77 = vmatpush1.msra.mxu0 %v46
  %78 = vmatprep.subr.mxu0 0.0
  %79 = vmatpush1.msra.mxu0 %v47
  %80 = vmatprep.subr.mxu0 0.0
  %81 = vmatpush1.msra.mxu0 %v48
  %82 = vmatprep.subr.mxu0 0.0
  %83 = vmatpush1.msra.mxu0 %v49
  %84 = vmatprep.subr.mxu0 0.0
  %85 = vmatpush1.msra.mxu0 %v50
  %86 = vmatprep.subr.mxu0 0.0
  %87 = vmatpush1.msra.mxu0 %v51
  %88 = vmatprep.subr.mxu0 0.0
  %89 = vmatpush1.msra.mxu0 %v52
  %90 = vmatprep.subr.mxu0 0.0
  %91 = vmatpush1.msra.mxu0 %v53
  %92 = vmatprep.subr.mxu0 0.0
  %93 = vmatpush1.msra.mxu0 %v54
  %94 = vmatprep.subr.mxu0 0.0
  %95 = vmatpush1.msra.mxu0 0.0
  %96 = vmatprep.subr.mxu0 0.0
  %97 = vmatpush1.msra.mxu0 0.0
  %98 = vmatprep.subr.mxu0 0.0
  %99 = vmatpush1.msra.mxu0 0.0
  %100 = vmatprep.subr.mxu0 0.0
  %101 = vmatpush1.msra.mxu0 0.0
  %102 = vmatprep.subr.mxu0 0.0
  %103 = vmatpush1.msra.mxu0 0.0
  %104 = vmatprep.subr.mxu0 0.0
  %105 = vmatpush1.msra.mxu0 0.0
  %106 = vmatprep.subr.mxu0 0.0
  %107 = vmatpush1.msra.mxu0 0.0
  %108 = vmatprep.subr.mxu0 0.0
  %109 = vmatpush1.msra.mxu0 0.0
  %110 = vmatprep.subr.mxu0 0.0
  %111 = vmatpush1.msra.mxu0 0.0
  %112 = vmatprep.subr.mxu0 0.0
  %113 = vmatpush1.msra.mxu0 0.0
  %114 = vmatprep.subr.mxu0 0.0
  %115 = vmatpush1.msra.mxu0 0.0
  %116 = vmatprep.subr.mxu0 0.0
  %117 = vmatpush1.msra.mxu0 0.0
  %118 = vmatprep.subr.mxu0 0.0
  %119 = vmatpush1.msra.mxu0 0.0
  %120 = vmatprep.subr.mxu0 0.0
  %121 = vmatpush1.msra.mxu0 0.0
  %122 = vmatprep.subr.mxu0 0.0
  %123 = vmatpush1.msra.mxu0 0.0
  %124 = vmatprep.subr.mxu0 0.0
  %125 = vmatpush1.msra.mxu0 0.0
  %126 = vmatprep.mubr.f32.mxu0 0.0
  %127 = vmatmul.mubr.f32.gmra.mrb[0].mxu0 %v38
  %v128 = vpop.f32.mrb[0].mxu0
  %v129 = vadd.f32 %v60, %v128
  %v130 = vpop.f32.mrb[0].mxu0
  %131 = vdwg.mxu0
  %v132 = vmax.f32 %v129, 0.0
  %vm133 = vcmask 523264
  %134 = vst.msk [vmem:[%s5] sm:$0xff] %vm133, %v132
  %s135 = smul.u32 0, 8
  %v136 = vlaneseq
  %v137 = vand.u32 %v136, 127
  %v138 = vstv %s135
  %v139 = vadd.s32 %v138, %v137
  %vm140 = vcmp.lt.s32.totalorder %v139, 8
  %v141 = vsel %vm140, 1, 0
  %v142 = vcvt.s32.f32 %v141
  %vm143 = vcmask 64512
  %v145 = vsel %vm143, %v142, 0
  %147 = vmatprep.subr.mxu0 0.0
  %148 = vmatpush1.msra.mxu0 %v132
  %149 = vmatprep.subr.mxu0 0.0
  %150 = vmatpush1.msra.mxu0 0.0
  %151 = vmatprep.subr.mxu0 0.0
  %152 = vmatpush1.msra.mxu0 0.0
  %153 = vmatprep.subr.mxu0 0.0
  %154 = vmatpush1.msra.mxu0 0.0
  %155 = vmatprep.subr.mxu0 0.0
  %156 = vmatpush1.msra.mxu0 0.0
  %157 = vmatprep.subr.mxu0 0.0
  %158 = vmatpush1.msra.mxu0 0.0
  %159 = vmatprep.subr.mxu0 0.0
  %160 = vmatpush1.msra.mxu0 0.0
  %161 = vmatprep.subr.mxu0 0.0
  %162 = vmatpush1.msra.mxu0 0.0
  %163 = vmatprep.subr.mxu0 0.0
  %164 = vmatpush1.msra.mxu0 0.0
  %165 = vmatprep.subr.mxu0 0.0
  %166 = vmatpush1.msra.mxu0 0.0
  %167 = vmatprep.subr.mxu0 0.0
  %168 = vmatpush1.msra.mxu0 0.0
  %169 = vmatprep.subr.mxu0 0.0
  %170 = vmatpush1.msra.mxu0 0.0
  %171 = vmatprep.subr.mxu0 0.0
  %172 = vmatpush1.msra.mxu0 0.0
  %173 = vmatprep.subr.mxu0 0.0
  %174 = vmatpush1.msra.mxu0 0.0
  %175 = vmatprep.subr.mxu0 0.0
  %176 = vmatpush1.msra.mxu0 0.0
  %177 = vmatprep.subr.mxu0 0.0
  %178 = vmatpush1.msra.mxu0 0.0
  %179 = vmatprep.subr.mxu0 0.0
  %180 = vmatpush1.msra.mxu0 0.0
  %181 = vmatprep.subr.mxu0 0.0
  %182 = vmatpush1.msra.mxu0 0.0
  %183 = vmatprep.subr.mxu0 0.0
  %184 = vmatpush1.msra.mxu0 0.0
  %185 = vmatprep.subr.mxu0 0.0
  %186 = vmatpush1.msra.mxu0 0.0
  %187 = vmatprep.subr.mxu0 0.0
  %188 = vmatpush1.msra.mxu0 0.0
  %189 = vmatprep.subr.mxu0 0.0
  %190 = vmatpush1.msra.mxu0 0.0
  %191 = vmatprep.subr.mxu0 0.0
  %192 = vmatpush1.msra.mxu0 0.0
  %193 = vmatprep.subr.mxu0 0.0
  %194 = vmatpush1.msra.mxu0 0.0
  %195 = vmatprep.subr.mxu0 0.0
  %196 = vmatpush1.msra.mxu0 0.0
  %197 = vmatprep.subr.mxu0 0.0
  %198 = vmatpush1.msra.mxu0 0.0
  %199 = vmatprep.subr.mxu0 0.0
  %200 = vmatpush1.msra.mxu0 0.0
  %201 = vmatprep.subr.mxu0 0.0
  %202 = vmatpush1.msra.mxu0 0.0
  %203 = vmatprep.subr.mxu0 0.0
  %204 = vmatpush1.msra.mxu0 0.0
  %205 = vmatprep.subr.mxu0 0.0
  %206 = vmatpush1.msra.mxu0 0.0
  %207 = vmatprep.subr.mxu0 0.0
  %208 = vmatpush1.msra.mxu0 0.0
  %209 = vmatprep.subr.mxu0 0.0
  %210 = vmatpush1.msra.mxu0 0.0
  %211 = vmatprep.mubr.f32.mxu0 0.0
  %212 = vmatmul.mubr.f32.gmra.mrb[0].mxu0 %v145
  %v213 = vpop.f32.mrb[0].mxu0
  %v214 = vadd.f32 0.0, %v213
  %v215 = vpop.f32.mrb[0].mxu0
  %216 = vdwg.mxu0
  %v217 = vmul.f32 %v132, %v132
  %218 = vmatprep.subr.mxu0 0.0
  %219 = vmatpush1.msra.mxu0 %v217
  %220 = vmatprep.subr.mxu0 0.0
  %221 = vmatpush1.msra.mxu0 0.0
  %222 = vmatprep.subr.mxu0 0.0
  %223 = vmatpush1.msra.mxu0 0.0
  %224 = vmatprep.subr.mxu0 0.0
  %225 = vmatpush1.msra.mxu0 0.0
  %226 = vmatprep.subr.mxu0 0.0
  %227 = vmatpush1.msra.mxu0 0.0
  %228 = vmatprep.subr.mxu0 0.0
  %229 = vmatpush1.msra.mxu0 0.0
  %230 = vmatprep.subr.mxu0 0.0
  %231 = vmatpush1.msra.mxu0 0.0
  %232 = vmatprep.subr.mxu0 0.0
  %233 = vmatpush1.msra.mxu0 0.0
  %234 = vmatprep.subr.mxu0 0.0
  %235 = vmatpush1.msra.mxu0 0.0
  %236 = vmatprep.subr.mxu0 0.0
  %237 = vmatpush1.msra.mxu0 0.0
  %238 = vmatprep.subr.mxu0 0.0
  %239 = vmatpush1.msra.mxu0 0.0
  %240 = vmatprep.subr.mxu0 0.0
  %241 = vmatpush1.msra.mxu0 0.0
  %242 = vmatprep.subr.mxu0 0.0
  %243 = vmatpush1.msra.mxu0 0.0
  %244 = vmatprep.subr.mxu0 0.0
  %245 = vmatpush1.msra.mxu0 0.0
  %246 = vmatprep.subr.mxu0 0.0
  %247 = vmatpush1.msra.mxu0 0.0
  %248 = vmatprep.subr.mxu0 0.0
  %249 = vmatpush1.msra.mxu0 0.0
  %250 = vmatprep.subr.mxu0 0.0
  %251 = vmatpush1.msra.mxu0 0.0
  %252 = vmatprep.subr.mxu0 0.0
  %253 = vmatpush1.msra.mxu0 0.0
  %254 = vmatprep.subr.mxu0 0.0
  %255 = vmatpush1.msra.mxu0 0.0
  %256 = vmatprep.subr.mxu0 0.0
  %257 = vmatpush1.msra.mxu0 0.0
  %258 = vmatprep.subr.mxu0 0.0
  %259 = vmatpush1.msra.mxu0 0.0
  %260 = vmatprep.subr.mxu0 0.0
  %261 = vmatpush1.msra.mxu0 0.0
  %262 = vmatprep.subr.mxu0 0.0
  %263 = vmatpush1.msra.mxu0 0.0
  %264 = vmatprep.subr.mxu0 0.0
  %265 = vmatpush1.msra.mxu0 0.0
  %266 = vmatprep.subr.mxu0 0.0
  %267 = vmatpush1.msra.mxu0 0.0
  %268 = vmatprep.subr.mxu0 0.0
  %269 = vmatpush1.msra.mxu0 0.0
  %270 = vmatprep.subr.mxu0 0.0
  %271 = vmatpush1.msra.mxu0 0.0
  %272 = vmatprep.subr.mxu0 0.0
  %273 = vmatpush1.msra.mxu0 0.0
  %274 = vmatprep.subr.mxu0 0.0
  %275 = vmatpush1.msra.mxu0 0.0
  %276 = vmatprep.subr.mxu0 0.0
  %277 = vmatpush1.msra.mxu0 0.0
  %278 = vmatprep.subr.mxu0 0.0
  %279 = vmatpush1.msra.mxu0 0.0
  %280 = vmatprep.subr.mxu0 0.0
  %281 = vmatpush1.msra.mxu0 0.0
  %282 = vmatprep.mubr.f32.mxu0 0.0
  %283 = vmatmul.mubr.f32.gmra.mrb[0].mxu0 %v145
  %v284 = vpop.f32.mrb[0].mxu0
  %v285 = vadd.f32 0.0, %v284
  %v286 = vpop.f32.mrb[0].mxu0
  %287 = vdwg.mxu0
  %v289 = vrot.slane %v285, 7
  %vm291 = vcmask 1040384
  %v292 = vsel %vm291, %v214, %v289
  %vm293 = vcmask 517120
  %294 = vst.msk [vmem:[%s6] sm:$0x3] %vm293, %v292
  // Predicated region
  $region22: #{net_forward.4} parent=0 // pred_check
    _
  $region23: #{net_forward.4} parent=0 // pred_check_branch
    %296 = sbr.rel (0) target = $region25
  $region24: #{net_forward.4} parent=0 // pred_region
    _
  $region25: #{net_forward.4} parent=0 // pred_fallthru
    _
  // Predicated region
  $region26: #{net_forward.4} parent=0 // pred_check
    _
  $region27: #{net_forward.4} parent=0 // pred_check_branch
    %298 = sbr.rel (0) target = $region29
  $region28: #{net_forward.4} parent=0 // pred_region
    _
  $region29: #{net_forward.4} parent=0 // pred_fallthru
    _
  // Predicated region
  $region30: #{net_forward.4} parent=0 // pred_check
    _
  $region31: #{net_forward.4} parent=0 // pred_check_branch
    %300 = sbr.rel (0) target = $region33
  $region32: #{net_forward.4} parent=0 // pred_region
    _
  $region33: #{net_forward.4} parent=0 // pred_fallthru
    _
  // Predicated region
  $region34: #{net_forward.4} parent=0 // pred_check
    _
  $region35: #{net_forward.4} parent=0 // pred_check_branch
    %302 = sbr.rel (0) target = $region37
  $region36: #{net_forward.4} parent=0 // pred_region
    _
  $region37: #{net_forward.4} parent=0 // pred_fallthru
    _

// kernel: net_forward.5
$region0: #{net_forward.5}
  #allocation0 [shape = 'u32[]', space=smem, size = 0x4, offset = 0x4, fixed_abs, tag = 'smem constant byte address 0x4 - core index']
  #allocation1 [shape = 'u32[144,128]{1,0:T(1,128)}', space=vmem, size = 0x12000, scoped, tag = 'internal scratch']
  #allocation2 [shape = 'f32[1,1]{1,0:T(1,128)S(1)}', space=vmem, size = 0x200, scoped, tag = 'scoped memory for net_forward.5']
  %s0 = inlined_call_operand.vmem [shape: f32[8,64], index: 0, kind: input, shape index: {}]
  %s1 = inlined_call_operand.vmem [shape: f32[1,64], index: 1, kind: input, shape index: {}]
  %s2 = inlined_call_operand.vmem [shape: f32[1,64], index: 2, kind: input, shape index: {}]
  %s3 = inlined_call_operand.vmem [shape: u32[8,64], index: 3, kind: input, shape index: {}]
  %s4 = inlined_call_operand.vmem [shape: f32[1,64], index: 4, kind: input, shape index: {}]
  %s5 = inlined_call_operand.<no memory space> [shape: f32[1,1], index: 5, kind: input, shape index: {}]
  %s6 = inlined_call_operand.hbm [shape: f32[1,8], index: 6, kind: output, shape index: {}]
  %s7 = sld [smem:[#allocation0]]
  $region34: #{net_forward.5} parent=0
    _
  %s9 = ssub.s32 1, %s7
  %s10 = scalar_select 0, %s9, %s7
  %v11 = vstv %s5
  %12 = vst [vmem:[#allocation2] sm:$0x1] %v11
  $region1: #{net_forward.5} parent=0
    #allocation3 [shape = 'u8[512]{0}', space=vmem, size = 0x400, scoped, tag = 'output window, operand 0, single buffered']
    #allocation4 [shape = 's32[1]{0}', space=sflag, size = 0x4, scoped, tag = 'scoped memory for net_forward.5']
    %13 = vsyncpa [#allocation4], 0
    // Predicated region
    $region2: #{net_forward.5} parent=1 // pred_check
      _
    $region3: #{net_forward.5} parent=1 // pred_check_branch
      %15 = sbr.rel (0) target = $region5
    $region4: #{net_forward.5} parent=1 // pred_region
      _
    $region5: #{net_forward.5} parent=1 // pred_fallthru
      _
    // Predicated region
    $region6: #{net_forward.5} parent=1 // pred_check
      _
    $region7: #{net_forward.5} parent=1 // pred_check_branch
      %17 = sbr.rel (0) target = $region9
    $region8: #{net_forward.5} parent=1 // pred_region
      _
    $region9: #{net_forward.5} parent=1 // pred_fallthru
      _
    // Predicated region
    $region10: #{net_forward.5} parent=1 // pred_check
      _
    $region11: #{net_forward.5} parent=1 // pred_check_branch
      %19 = sbr.rel (0) target = $region13
    $region12: #{net_forward.5} parent=1 // pred_region
      _
    $region13: #{net_forward.5} parent=1 // pred_fallthru
      _
    // Predicated region
    $region14: #{net_forward.5} parent=1 // pred_check
      _
    $region15: #{net_forward.5} parent=1 // pred_check_branch
      %21 = sbr.rel (0) target = $region17
    $region16: #{net_forward.5} parent=1 // pred_region
      _
    $region17: #{net_forward.5} parent=1 // pred_fallthru
      _
    // Predicated region
    $region18: #{net_forward.5} parent=1 // pred_check
      _
    $region19: #{net_forward.5} parent=1 // pred_check_branch
      %23 = sbr.rel (0) target = $region21
    $region20: #{net_forward.5} parent=1 // pred_region
      _
    $region21: #{net_forward.5} parent=1 // pred_fallthru
      _
    // Predicated region
    $region22: #{net_forward.5} parent=1 // pred_check
      _
    $region23: #{net_forward.5} parent=1 // pred_check_branch
      %25 = sbr.rel (0) target = $region25
    $region24: #{net_forward.5} parent=1 // pred_region
      _
    $region25: #{net_forward.5} parent=1 // pred_fallthru
      _
    %v26 = vld [vmem:[%s0] sm:$0xff]
    %v27 = vld [vmem:[%s1] sm:$0x1]
    %v29 = vlaneseq
    %v30 = vshrl.u32 %v29, 7
    %v31 = vsub.s32 0, %v30
    %v32 = vrot.slane %v27, %v31
    %v34 = vmul.f32 %v26, %v32
    %v35 = vld [vmem:[%s2] sm:$0x1]
    %v37 = vlaneseq
    %v38 = vshrl.u32 %v37, 7
    %v39 = vsub.s32 0, %v38
    %v40 = vrot.slane %v35, %v39
    %v42 = vadd.f32 %v34, %v40
    %v43 = vld [vmem:[%s3] sm:$0xff]
    %vm44 = vcmp.ge.u32.totalorder %v43, 1288490188
    %v45 = vmul.f32 %v42, 1.4285715
    %v46 = vsel %vm44, %v45, 0.0
    %v47 = vld [vmem:[%s4] sm:$0x1]
    %v49 = vlaneseq
    %v50 = vshrl.u32 %v49, 7
    %v51 = vsub.s32 0, %v50
    %v52 = vrot.slane %v47, %v51
    %v54 = vmul.f32 %v46, %v52
    %vm55 = vcmask 523264
    %v56 = vsel %vm55, %v54, 0.0
    %57 = vadd.xlane.f32.xlu0 %v56
    %v58 = vpop.xlane.xlu0 %57
    %v59 = vld [vmem:[#allocation2] sm:$0x1]
    %61 = vset.pattern.permute.xlu0 0
    %62 = vperm.xlu0 %61, %v59
    %v63 = vpop.permute.xlu0 %62
    %v65 = vlaneseq
    %v66 = vshrl.u32 %v65, 7
    %v67 = vsub.s32 0, %v66
    %v68 = vrot.slane %v63, %v67
    %v69 = vadd.f32 %v58, %v68
    %v71 = vlaneseq
    %v72 = vand.u32 %v71, 127
    %v73 = vlaneseq
    %v74 = vshrl.u32 %v73, 7
    %v75 = vsub.s32 %v72, %v74
    %v76 = vrot.slane %v69, %v75
    %vm78 = vcmask 57344
    %79 = vst.msk [vmem:[#allocation3] sm:$0x1] %vm78, %v76
    // Predicated region
    $region26: #{net_forward.5} parent=1 // pred_check
      _
    $region27: #{net_forward.5} parent=1 // pred_check_branch
      %81 = sbr.rel (0) target = $region29
    $region28: #{net_forward.5} parent=1 // pred_region
      %s83 = ssub.s32 16, 16
      %84 = vsyncadd [#allocation4], %s83
      %s86 = sshll.u32 [#allocation3], 4
      %s87 = int_to_ptr.vmem [resolvable:$true] %s86
      %89 = dma.vmem_to_hbm [thread:$0]  %s87, 16, %s6, [#allocation4]
    $region29: #{net_forward.5} parent=1 // pred_fallthru
      _
    // Predicated region
    $region30: #{net_forward.5} parent=1 // pred_check
      _
    $region31: #{net_forward.5} parent=1 // pred_check_branch
      %91 = sbr.rel (0) target = $region33
    $region32: #{net_forward.5} parent=1 // pred_region
      %92 = dma.done [#allocation4], 16
    $region33: #{net_forward.5} parent=1 // pred_fallthru
      _
    %93 = vsyncpa [#allocation4], 1

</llo_original>
